<compile_context>
chip_gen: v7x
topology: tpu7x:2x2x1
jax: 0.10.0
libtpu: 0.0.40
codegen_flags: <defaults>
</compile_context>

<pallas_src>
import numpy as np
import jax
import jax.numpy as jnp
from jax.experimental import pallas as pl
from jax.experimental.pallas import tpu as pltpu


def _round_up(a, b):
    return -(-a // b) * b


# Single-buffer constant-weight inputs when BlockSpec(pipeline_mode=...) is
# available; otherwise fall back to the default double-buffering.
try:
    pl.BlockSpec((8, 128), lambda i: (0, 0), pipeline_mode=pl.Buffered(1))
    _CONST_PIPELINE = {"pipeline_mode": pl.Buffered(1)}
except Exception:                                      # pragma: no cover
    _CONST_PIPELINE = {}


# ----------------------------- constants (numpy) -----------------------------

def _hz_to_mel(f):
    return 2595.0 * np.log10(1.0 + np.asarray(f, np.float64) / 700.0)


def _mel_to_hz(m):
    return 700.0 * (10.0 ** (np.asarray(m, np.float64) / 2595.0) - 1.0)


def melscale_fbanks(n_freqs, f_min, f_max, n_mels, sample_rate):
    """torchaudio.functional.melscale_fbanks (htk scale, norm=None)."""
    all_freqs = np.linspace(0.0, sample_rate // 2, n_freqs)
    m_pts = np.linspace(_hz_to_mel(f_min), _hz_to_mel(f_max), n_mels + 2)
    f_pts = _mel_to_hz(m_pts)
    f_diff = f_pts[1:] - f_pts[:-1]
    slopes = f_pts[None, :] - all_freqs[:, None]
    down = -slopes[:, :-2] / f_diff[:-1]
    up = slopes[:, 2:] / f_diff[1:]
    return np.maximum(0.0, np.minimum(down, up)).astype(np.float32)


def dft_matrices(fft_size, win_length):
    """Real/imag DFT matrices with the (periodic) hann window folded in."""
    n = np.arange(win_length)
    win = 0.5 * (1.0 - np.cos(2.0 * np.pi * n / win_length))      # hann, periodic
    if win_length < fft_size:                                      # centre-pad window
        left = (fft_size - win_length) // 2
        win = np.pad(win, (left, fft_size - win_length - left))
    nn = np.arange(fft_size)
    kk = np.arange(fft_size // 2 + 1)
    ang = 2.0 * np.pi * np.outer(nn, kk) / fft_size                # (n_fft, n_freq)
    w_real = (win[:, None] * np.cos(ang)).astype(np.float32)
    w_imag = (-win[:, None] * np.sin(ang)).astype(np.float32)
    return w_real, w_imag


# --------------------------------- wrapper -----------------------------------

def stft_loss(x, y, *, fft_size, shift_size, win_length, n_mels, sample_rate,
              frame_tile=None):
    """Equivalent of STFTLoss.forward: the log-mel spectral-convergence scalar."""
    x = x.astype(jnp.float32)
    y = y.astype(jnp.float32)
    B, T = x.shape
    n_freq = fft_size // 2 + 1
    pad = fft_size // 2
    Tp = T + 2 * pad
    n_frames = 1 + (Tp - fft_size) // shift_size

    if frame_tile is None:
        # slab / reim / power scale linearly with the frame tile: drop to 128
        # for large ffts so the working set fits v7x's 64 MiB VMEM.
        frame_tile = 128 if fft_size >= 2048 else 256

    # --- framing granularity ---------------------------------------------------
    if fft_size % shift_size == 0:
        row_w = shift_size                    # hop rows; frames rebuilt in-kernel
        r = fft_size // shift_size
    else:
        # TODO(synk): frame in-kernel from the flat padded signal (pl.ds element
        # windows / manual DMA) instead of this wrapper-side gather fallback.
        row_w = fft_size
        r = 1
    # TODO(synk): for shift < 128 the hop-row blocks are lane-sparse; repacking
    # HBM as (B, n_hops/g, g*shift) with g = 128//shift and unpacking in-kernel
    # would make the input DMA / slab assembly fully lane-dense.

    row_unit = 16                                         # bf16 sublane packing
    halo = _round_up(max(r - 1, 1), row_unit)             # extra hop rows per tile
    ft = min(_round_up(frame_tile, row_unit), _round_up(n_frames, row_unit))
    ft = max(halo, _round_up(ft, halo))                   # halo index needs ft % halo == 0
    n_tiles = -(-n_frames // ft)
    rows_valid_edge = n_frames - (n_tiles - 1) * ft       # valid rows of last tile

    nf_pad = _round_up(n_freq, 128)                       # lane-aligned re/im halves
    m_pad = _round_up(n_mels, 128)                        # lane-dense mel axis

    # --- inputs: reflect-padded signal as bf16 hop rows (B, n_hops, row_w) -----
    n_hops = n_tiles * ft + halo
    xp = jnp.pad(x, ((0, 0), (pad, pad)), mode="reflect")
    yp = jnp.pad(y, ((0, 0), (pad, pad)), mode="reflect")
    if r > 1:
        n_hops = max(n_hops, -(-Tp // row_w))
        total = n_hops * row_w
        x_rows = jnp.pad(xp, ((0, 0), (0, total - Tp))).reshape(B, n_hops, row_w)
        y_rows = jnp.pad(yp, ((0, 0), (0, total - Tp))).reshape(B, n_hops, row_w)
    else:
        idx = (np.arange(n_frames)[:, None] * shift_size +
               np.arange(fft_size)[None, :])
        x_rows = jnp.pad(xp[:, idx], ((0, 0), (0, n_hops - n_frames), (0, 0)))
        y_rows = jnp.pad(yp[:, idx], ((0, 0), (0, n_hops - n_frames), (0, 0)))
    x_rows = x_rows.astype(jnp.bfloat16)
    y_rows = y_rows.astype(jnp.bfloat16)

    # --- constants: fused windowed-DFT weight (bf16) + mel filterbank (f32) ----
    wr_np, wi_np = dft_matrices(fft_size, win_length)
    w_np = np.zeros((fft_size, 2 * nf_pad), np.float32)
    w_np[:, :n_freq] = wr_np
    w_np[:, nf_pad:nf_pad + n_freq] = wi_np
    mel_np = np.zeros((nf_pad, m_pad), np.float32)
    mel_np[:n_freq, :n_mels] = melscale_fbanks(
        n_freq, 0.0, float(sample_rate // 2), n_mels, sample_rate)
    w_bf = jnp.asarray(w_np, dtype=jnp.bfloat16)
    mel_f32 = jnp.asarray(mel_np, dtype=jnp.float32)

    need_row_mask = n_tiles * ft != n_frames
    need_col_mask = n_mels < m_pad

    # ------------------------------ kernel ------------------------------------
    def kernel(xm_ref, xhalo_ref, ym_ref, yhalo_ref, w_ref, mel_ref,
               num_ref, den_ref, slab):
        i = pl.program_id(1)

        # hop rows [i*ft, i*ft + ft + halo) of both signals (tiny join only).
        hx = jnp.concatenate([xm_ref[...], xhalo_ref[...]], axis=0)
        hy = jnp.concatenate([ym_ref[...], yhalo_ref[...]], axis=0)

        # assemble the (2*ft, n_fft) frame slab: frame f = hop rows f..f+r-1,
        # so column block j of the slab is hop-row window [j, j+ft).
        for j in range(r):
            cols = slice(j * row_w, (j + 1) * row_w)
            slab[0:ft, cols] = hx[j:j + ft, :]
            slab[ft:2 * ft, cols] = hy[j:j + ft, :]

        # single K = n_fft matmul against the fused [Wr | Wi] windowed DFT.
        reim = jnp.dot(slab[...], w_ref[...], preferred_element_type=jnp.float32)
        re = reim[:, :nf_pad]
        im = reim[:, nf_pad:]
        power = re * re + im * im                                   # |STFT|^2, f32
        melspec = jnp.dot(power, mel_ref[...],
                          preferred_element_type=jnp.float32)       # (2*ft, m_pad)
        mag = (jnp.log(1e-5 + melspec) + 4.0) * 0.25                # (log m + 4)/4
        x_mag = mag[:ft, :]
        y_mag = mag[ft:, :]
        d = jnp.abs(y_mag - x_mag)
        a = jnp.abs(y_mag)

        # mask padded frame rows (last tile only) and padded mel lanes.
        if need_row_mask or need_col_mask:
            rows = jax.lax.broadcasted_iota(jnp.int32, (ft, m_pad), 0)
            cols = jax.lax.broadcasted_iota(jnp.int32, (ft, m_pad), 1)
            valid = (jnp.where(i == n_tiles - 1, rows_valid_edge, ft)
                     if need_row_mask else ft)
            keep = jnp.logical_and(rows < valid, cols < n_mels)
            d = jnp.where(keep, d, 0.0)
            a = jnp.where(keep, a, 0.0)

        # per-(batch, tile) partial sums; combined in the wrapper so both grid
        # axes stay "parallel" (v7x megacore friendly, no cross-step state).
        num_ref[...] = jnp.sum(d).reshape(1, 1, 1, 1)
        den_ref[...] = jnp.sum(a).reshape(1, 1, 1, 1)

    num, den = pl.pallas_call(
        kernel,
        out_shape=(jax.ShapeDtypeStruct((B, n_tiles, 1, 1), jnp.float32),
                   jax.ShapeDtypeStruct((B, n_tiles, 1, 1), jnp.float32)),
        grid_spec=pltpu.PrefetchScalarGridSpec(
            num_scalar_prefetch=0,
            grid=(B, n_tiles),
            in_specs=[
                pl.BlockSpec((None, ft, row_w), lambda b, i: (b, i, 0)),
                pl.BlockSpec((None, halo, row_w),
                             lambda b, i: (b, (i + 1) * (ft // halo), 0)),
                pl.BlockSpec((None, ft, row_w), lambda b, i: (b, i, 0)),
                pl.BlockSpec((None, halo, row_w),
                             lambda b, i: (b, (i + 1) * (ft // halo), 0)),
                pl.BlockSpec((fft_size, 2 * nf_pad), lambda b, i: (0, 0),
                             **_CONST_PIPELINE),
                pl.BlockSpec((nf_pad, m_pad), lambda b, i: (0, 0),
                             **_CONST_PIPELINE),
            ],
            out_specs=[
                pl.BlockSpec((1, 1, 1, 1), lambda b, i: (b, i, 0, 0)),
                pl.BlockSpec((1, 1, 1, 1), lambda b, i: (b, i, 0, 0)),
            ],
            scratch_shapes=[pltpu.VMEM((2 * ft, fft_size), jnp.bfloat16)],
        ),
        compiler_params=pltpu.CompilerParams(
            dimension_semantics=("parallel", "parallel"),
            vmem_limit_bytes=56 * 1024 * 1024),
    )(x_rows, x_rows, y_rows, y_rows, w_bf, mel_f32)

    return jnp.sum(num) / jnp.sum(den)


# ----------------------------------- main ------------------------------------

if __name__ == "__main__":
    key = jax.random.PRNGKey(0)
    kx, ky = jax.random.split(key)

    B, T = 2, 256
    fft_size, shift_size, win_length = 64, 16, 64
    n_mels, sample_rate = 16, 8000

    x = jax.random.normal(kx, (B, T), dtype=jnp.float32)
    y = jax.random.normal(ky, (B, T), dtype=jnp.float32)

    loss = stft_loss(x, y,
                     fft_size=fft_size, shift_size=shift_size,
                     win_length=win_length, n_mels=n_mels,
                     sample_rate=sample_rate)
    loss = jax.block_until_ready(loss)
    assert jnp.isfinite(loss)
    print("KERNEL_OK")
</pallas_src>

<mosaic_0001>
module attributes {stable_mosaic.version = 11 : i64} {
  func.func @kernel(%arg0: i32, %arg1: i32, %arg2: memref<1x32x16xbf16, #tpu.memory_space<vmem>>, %arg3: memref<1x16x16xbf16, #tpu.memory_space<vmem>>, %arg4: memref<1x32x16xbf16, #tpu.memory_space<vmem>>, %arg5: memref<1x16x16xbf16, #tpu.memory_space<vmem>>, %arg6: memref<64x256xbf16, #tpu.memory_space<vmem>>, %arg7: memref<128x128xf32, #tpu.memory_space<vmem>>, %arg8: memref<1x1x1x1xf32, #tpu.memory_space<vmem>>, %arg9: memref<1x1x1x1xf32, #tpu.memory_space<vmem>>, %arg10: memref<64x64xbf16, #tpu.memory_space<vmem>>) attributes {dimension_semantics = [#tpu.dimension_semantics<parallel>, #tpu.dimension_semantics<parallel>], iteration_bounds = array<i64: 2, 1>, scalar_prefetch = 0 : i64, scratch_operands = 1 : i64, tpu.core_type = #tpu.core_type<tc>, window_params = [{transform_indices = @transform_0, window_bounds = array<i64: 1, 32, 16>}, {transform_indices = @transform_1, window_bounds = array<i64: 1, 16, 16>}, {transform_indices = @transform_2, window_bounds = array<i64: 1, 32, 16>}, {transform_indices = @transform_3, window_bounds = array<i64: 1, 16, 16>}, {pipeline_mode = #tpu.pipeline_mode<synchronous>, transform_indices = @transform_4, window_bounds = array<i64: 64, 256>}, {pipeline_mode = #tpu.pipeline_mode<synchronous>, transform_indices = @transform_5, window_bounds = array<i64: 128, 128>}, {transform_indices = @transform_6, window_bounds = array<i64: 1, 1, 1, 1>}, {transform_indices = @transform_7, window_bounds = array<i64: 1, 1, 1, 1>}]} {
    %c0 = arith.constant 0 : index
    %c0_0 = arith.constant 0 : index
    %c0_1 = arith.constant 0 : index
    %0 = vector.load %arg2[%c0, %c0_0, %c0_1] : memref<1x32x16xbf16, #tpu.memory_space<vmem>>, vector<1x32x16xbf16>
    %1 = vector.shape_cast %0 : vector<1x32x16xbf16> to vector<32x16xbf16>
    %c0_2 = arith.constant 0 : index
    %c0_3 = arith.constant 0 : index
    %c0_4 = arith.constant 0 : index
    %2 = vector.load %arg3[%c0_2, %c0_3, %c0_4] : memref<1x16x16xbf16, #tpu.memory_space<vmem>>, vector<1x16x16xbf16>
    %3 = vector.shape_cast %2 : vector<1x16x16xbf16> to vector<16x16xbf16>
    %4 = tpu.concatenate %1, %3 in 0 : vector<32x16xbf16>, vector<16x16xbf16> -> vector<48x16xbf16>
    %c0_5 = arith.constant 0 : index
    %c0_6 = arith.constant 0 : index
    %c0_7 = arith.constant 0 : index
    %5 = vector.load %arg4[%c0_5, %c0_6, %c0_7] : memref<1x32x16xbf16, #tpu.memory_space<vmem>>, vector<1x32x16xbf16>
    %6 = vector.shape_cast %5 : vector<1x32x16xbf16> to vector<32x16xbf16>
    %c0_8 = arith.constant 0 : index
    %c0_9 = arith.constant 0 : index
    %c0_10 = arith.constant 0 : index
    %7 = vector.load %arg5[%c0_8, %c0_9, %c0_10] : memref<1x16x16xbf16, #tpu.memory_space<vmem>>, vector<1x16x16xbf16>
    %8 = vector.shape_cast %7 : vector<1x16x16xbf16> to vector<16x16xbf16>
    %9 = tpu.concatenate %6, %8 in 0 : vector<32x16xbf16>, vector<16x16xbf16> -> vector<48x16xbf16>
    %10 = vector.extract_strided_slice %4 {offsets = [0, 0], sizes = [32, 16], strides = [1, 1]} : vector<48x16xbf16> to vector<32x16xbf16>
    %c0_11 = arith.constant 0 : index
    %c0_12 = arith.constant 0 : index
    %11 = vector.load %arg10[%c0_11, %c0_12] : memref<64x64xbf16, #tpu.memory_space<vmem>>, vector<32x16xbf16>
    tpu.vector_store %arg10[%c0_11, %c0_12], %10 {strides = array<i32>} : memref<64x64xbf16, #tpu.memory_space<vmem>>, vector<32x16xbf16>,
    %12 = vector.extract_strided_slice %9 {offsets = [0, 0], sizes = [32, 16], strides = [1, 1]} : vector<48x16xbf16> to vector<32x16xbf16>
    %c32 = arith.constant 32 : index
    %c0_13 = arith.constant 0 : index
    %13 = vector.load %arg10[%c32, %c0_13] : memref<64x64xbf16, #tpu.memory_space<vmem>>, vector<32x16xbf16>
    tpu.vector_store %arg10[%c32, %c0_13], %12 {strides = array<i32>} : memref<64x64xbf16, #tpu.memory_space<vmem>>, vector<32x16xbf16>,
    %14 = vector.extract_strided_slice %4 {offsets = [1, 0], sizes = [32, 16], strides = [1, 1]} : vector<48x16xbf16> to vector<32x16xbf16>
    %c0_14 = arith.constant 0 : index
    %c16 = arith.constant 16 : index
    %15 = vector.load %arg10[%c0_14, %c16] : memref<64x64xbf16, #tpu.memory_space<vmem>>, vector<32x16xbf16>
    tpu.vector_store %arg10[%c0_14, %c16], %14 {strides = array<i32>} : memref<64x64xbf16, #tpu.memory_space<vmem>>, vector<32x16xbf16>,
    %16 = vector.extract_strided_slice %9 {offsets = [1, 0], sizes = [32, 16], strides = [1, 1]} : vector<48x16xbf16> to vector<32x16xbf16>
    %c32_15 = arith.constant 32 : index
    %c16_16 = arith.constant 16 : index
    %17 = vector.load %arg10[%c32_15, %c16_16] : memref<64x64xbf16, #tpu.memory_space<vmem>>, vector<32x16xbf16>
    tpu.vector_store %arg10[%c32_15, %c16_16], %16 {strides = array<i32>} : memref<64x64xbf16, #tpu.memory_space<vmem>>, vector<32x16xbf16>,
    %18 = vector.extract_strided_slice %4 {offsets = [2, 0], sizes = [32, 16], strides = [1, 1]} : vector<48x16xbf16> to vector<32x16xbf16>
    %c0_17 = arith.constant 0 : index
    %c32_18 = arith.constant 32 : index
    %19 = vector.load %arg10[%c0_17, %c32_18] : memref<64x64xbf16, #tpu.memory_space<vmem>>, vector<32x16xbf16>
    tpu.vector_store %arg10[%c0_17, %c32_18], %18 {strides = array<i32>} : memref<64x64xbf16, #tpu.memory_space<vmem>>, vector<32x16xbf16>,
    %20 = vector.extract_strided_slice %9 {offsets = [2, 0], sizes = [32, 16], strides = [1, 1]} : vector<48x16xbf16> to vector<32x16xbf16>
    %c32_19 = arith.constant 32 : index
    %c32_20 = arith.constant 32 : index
    %21 = vector.load %arg10[%c32_19, %c32_20] : memref<64x64xbf16, #tpu.memory_space<vmem>>, vector<32x16xbf16>
    tpu.vector_store %arg10[%c32_19, %c32_20], %20 {strides = array<i32>} : memref<64x64xbf16, #tpu.memory_space<vmem>>, vector<32x16xbf16>,
    %22 = vector.extract_strided_slice %4 {offsets = [3, 0], sizes = [32, 16], strides = [1, 1]} : vector<48x16xbf16> to vector<32x16xbf16>
    %c0_21 = arith.constant 0 : index
    %c48 = arith.constant 48 : index
    %23 = vector.load %arg10[%c0_21, %c48] : memref<64x64xbf16, #tpu.memory_space<vmem>>, vector<32x16xbf16>
    tpu.vector_store %arg10[%c0_21, %c48], %22 {strides = array<i32>} : memref<64x64xbf16, #tpu.memory_space<vmem>>, vector<32x16xbf16>,
    %24 = vector.extract_strided_slice %9 {offsets = [3, 0], sizes = [32, 16], strides = [1, 1]} : vector<48x16xbf16> to vector<32x16xbf16>
    %c32_22 = arith.constant 32 : index
    %c48_23 = arith.constant 48 : index
    %25 = vector.load %arg10[%c32_22, %c48_23] : memref<64x64xbf16, #tpu.memory_space<vmem>>, vector<32x16xbf16>
    tpu.vector_store %arg10[%c32_22, %c48_23], %24 {strides = array<i32>} : memref<64x64xbf16, #tpu.memory_space<vmem>>, vector<32x16xbf16>,
    %c0_24 = arith.constant 0 : index
    %c0_25 = arith.constant 0 : index
    %26 = vector.load %arg10[%c0_24, %c0_25] : memref<64x64xbf16, #tpu.memory_space<vmem>>, vector<64x64xbf16>
    %c0_26 = arith.constant 0 : index
    %c0_27 = arith.constant 0 : index
    %27 = vector.load %arg6[%c0_26, %c0_27] : memref<64x256xbf16, #tpu.memory_space<vmem>>, vector<64x256xbf16>
    %cst = arith.constant dense<0.000000e+00> : vector<64x256xf32>
    %28 = tpu.matmul %26, %27, %cst {dimension_numbers = #tpu.dot_dimension_numbers<[1], [0], [0], [1], [0, 0, 1, 1], [], []>} : vector<64x64xbf16>, vector<64x256xbf16>, vector<64x256xf32> -> vector<64x256xf32>
    %29 = vector.extract_strided_slice %28 {offsets = [0, 0], sizes = [64, 128], strides = [1, 1]} : vector<64x256xf32> to vector<64x128xf32>
    %30 = vector.extract_strided_slice %28 {offsets = [0, 128], sizes = [64, 128], strides = [1, 1]} : vector<64x256xf32> to vector<64x128xf32>
    %31 = arith.mulf %29, %29 : vector<64x128xf32>
    %32 = arith.mulf %30, %30 : vector<64x128xf32>
    %33 = arith.addf %31, %32 : vector<64x128xf32>
    %c0_28 = arith.constant 0 : index
    %c0_29 = arith.constant 0 : index
    %34 = vector.load %arg7[%c0_28, %c0_29] : memref<128x128xf32, #tpu.memory_space<vmem>>, vector<128x128xf32>
    %cst_30 = arith.constant dense<0.000000e+00> : vector<64x128xf32>
    %35 = tpu.matmul %33, %34, %cst_30 {dimension_numbers = #tpu.dot_dimension_numbers<[1], [0], [0], [1], [0, 0, 1, 1], [], []>} : vector<64x128xf32>, vector<128x128xf32>, vector<64x128xf32> -> vector<64x128xf32>
    %cst_31 = arith.constant 9.99999974E-6 : f32
    %36 = vector.broadcast %cst_31 : f32 to vector<64x128xf32>
    %37 = arith.addf %36, %35 : vector<64x128xf32>
    %38 = math.log %37 : vector<64x128xf32>
    %cst_32 = arith.constant 4.000000e+00 : f32
    %39 = vector.broadcast %cst_32 : f32 to vector<64x128xf32>
    %40 = arith.addf %38, %39 : vector<64x128xf32>
    %cst_33 = arith.constant 2.500000e-01 : f32
    %41 = vector.broadcast %cst_33 : f32 to vector<64x128xf32>
    %42 = arith.mulf %40, %41 : vector<64x128xf32>
    %43 = vector.extract_strided_slice %42 {offsets = [0, 0], sizes = [32, 128], strides = [1, 1]} : vector<64x128xf32> to vector<32x128xf32>
    %44 = vector.extract_strided_slice %42 {offsets = [32, 0], sizes = [32, 128], strides = [1, 1]} : vector<64x128xf32> to vector<32x128xf32>
    %45 = arith.subf %44, %43 : vector<32x128xf32>
    %46 = math.absf %45 : vector<32x128xf32>
    %47 = math.absf %44 : vector<32x128xf32>
    %48 = tpu.iota {dimensions = array<i32: 0>} : vector<32x128xi32>
    %49 = tpu.iota {dimensions = array<i32: 1>} : vector<32x128xi32>
    %c0_i32 = arith.constant 0 : i32
    %50 = arith.cmpi eq, %arg1, %c0_i32 : i32
    %c17_i32 = arith.constant 17 : i32
    %c32_i32 = arith.constant 32 : i32
    %51 = arith.select %50, %c17_i32, %c32_i32 : i32
    %52 = vector.broadcast %51 : i32 to vector<32x128xi32>
    %53 = arith.cmpi slt, %48, %52 : vector<32x128xi32>
    %c16_i32 = arith.constant 16 : i32
    %54 = vector.broadcast %c16_i32 : i32 to vector<32x128xi32>
    %55 = arith.cmpi slt, %49, %54 : vector<32x128xi32>
    %56 = arith.andi %53, %55 : vector<32x128xi1>
    %cst_34 = arith.constant 0.000000e+00 : f32
    %57 = vector.broadcast %cst_34 : f32 to vector<32x128xf32>
    %58 = arith.select %56, %46, %57 : vector<32x128xi1>, vector<32x128xf32>
    %cst_35 = arith.constant 0.000000e+00 : f32
    %59 = vector.broadcast %cst_35 : f32 to vector<32x128xf32>
    %60 = arith.select %56, %47, %59 : vector<32x128xi1>, vector<32x128xf32>
    %61 = vector.shape_cast %58 : vector<32x128xf32> to vector<1x32x128xf32>
    %cst_36 = arith.constant dense<0.000000e+00> : vector<1xf32>
    %62 = vector.multi_reduction <add>, %61, %cst_36 [1, 2] : vector<1x32x128xf32> to vector<1xf32>
    %63 = vector.shape_cast %62 : vector<1xf32> to vector<1x1x1xf32>
    %64 = vector.extract %63[0, 0, 0] : f32 from vector<1x1x1xf32>
    %65 = vector.broadcast %64 : f32 to vector<1x1x1x1xf32>
    %c0_37 = arith.constant 0 : index
    %c0_38 = arith.constant 0 : index
    %c0_39 = arith.constant 0 : index
    %c0_40 = arith.constant 0 : index
    %66 = vector.load %arg8[%c0_37, %c0_38, %c0_39, %c0_40] : memref<1x1x1x1xf32, #tpu.memory_space<vmem>>, vector<1x1x1x1xf32>
    tpu.vector_store %arg8[%c0_37, %c0_38, %c0_39, %c0_40], %65 {strides = array<i32>} : memref<1x1x1x1xf32, #tpu.memory_space<vmem>>, vector<1x1x1x1xf32>,
    %67 = vector.shape_cast %60 : vector<32x128xf32> to vector<1x32x128xf32>
    %cst_41 = arith.constant dense<0.000000e+00> : vector<1xf32>
    %68 = vector.multi_reduction <add>, %67, %cst_41 [1, 2] : vector<1x32x128xf32> to vector<1xf32>
    %69 = vector.shape_cast %68 : vector<1xf32> to vector<1x1x1xf32>
    %70 = vector.extract %69[0, 0, 0] : f32 from vector<1x1x1xf32>
    %71 = vector.broadcast %70 : f32 to vector<1x1x1x1xf32>
    %c0_42 = arith.constant 0 : index
    %c0_43 = arith.constant 0 : index
    %c0_44 = arith.constant 0 : index
    %c0_45 = arith.constant 0 : index
    %72 = vector.load %arg9[%c0_42, %c0_43, %c0_44, %c0_45] : memref<1x1x1x1xf32, #tpu.memory_space<vmem>>, vector<1x1x1x1xf32>
    tpu.vector_store %arg9[%c0_42, %c0_43, %c0_44, %c0_45], %71 {strides = array<i32>} : memref<1x1x1x1xf32, #tpu.memory_space<vmem>>, vector<1x1x1x1xf32>,
    return
  }
  func.func @transform_0(%arg0: i32, %arg1: i32) -> (i32, i32, i32) {
    %c0_i32 = arith.constant 0 : i32
    %c0_i32_0 = arith.constant 0 : i32
    return %arg0, %arg1, %c0_i32 : i32, i32, i32
  }
  func.func @transform_1(%arg0: i32, %arg1: i32) -> (i32, i32, i32) {
    %c1_i32 = arith.constant 1 : i32
    %0 = arith.addi %arg1, %c1_i32 : i32
    %c2_i32 = arith.constant 2 : i32
    %1 = arith.muli %0, %c2_i32 : i32
    %c0_i32 = arith.constant 0 : i32
    %c0_i32_0 = arith.constant 0 : i32
    return %arg0, %1, %c0_i32 : i32, i32, i32
  }
  func.func @transform_2(%arg0: i32, %arg1: i32) -> (i32, i32, i32) {
    %c0_i32 = arith.constant 0 : i32
    %c0_i32_0 = arith.constant 0 : i32
    return %arg0, %arg1, %c0_i32 : i32, i32, i32
  }
  func.func @transform_3(%arg0: i32, %arg1: i32) -> (i32, i32, i32) {
    %c1_i32 = arith.constant 1 : i32
    %0 = arith.addi %arg1, %c1_i32 : i32
    %c2_i32 = arith.constant 2 : i32
    %1 = arith.muli %0, %c2_i32 : i32
    %c0_i32 = arith.constant 0 : i32
    %c0_i32_0 = arith.constant 0 : i32
    return %arg0, %1, %c0_i32 : i32, i32, i32
  }
  func.func @transform_4(%arg0: i32, %arg1: i32) -> (i32, i32) {
    %c0_i32 = arith.constant 0 : i32
    %c0_i32_0 = arith.constant 0 : i32
    %c0_i32_1 = arith.constant 0 : i32
    return %c0_i32, %c0_i32_0 : i32, i32
  }
  func.func @transform_5(%arg0: i32, %arg1: i32) -> (i32, i32) {
    %c0_i32 = arith.constant 0 : i32
    %c0_i32_0 = arith.constant 0 : i32
    %c0_i32_1 = arith.constant 0 : i32
    return %c0_i32, %c0_i32_0 : i32, i32
  }
  func.func @transform_6(%arg0: i32, %arg1: i32) -> (i32, i32, i32, i32) {
    %c0_i32 = arith.constant 0 : i32
    %c0_i32_0 = arith.constant 0 : i32
    %c0_i32_1 = arith.constant 0 : i32
    return %arg0, %arg1, %c0_i32, %c0_i32_0 : i32, i32, i32, i32
  }
  func.func @transform_7(%arg0: i32, %arg1: i32) -> (i32, i32, i32, i32) {
    %c0_i32 = arith.constant 0 : i32
    %c0_i32_0 = arith.constant 0 : i32
    %c0_i32_1 = arith.constant 0 : i32
    return %arg0, %arg1, %c0_i32, %c0_i32_0 : i32, i32, i32, i32
  }
}

</mosaic_0001>

<llo_original>
// kernel: tpu_custom_call.1
$region0: #{tpu_custom_call.1}
  #allocation0 [shape = 'u32[]', space=smem, size = 0x4, offset = 0x4, fixed_abs, tag = 'smem constant byte address 0x4 - core index']
  #allocation1 [shape = 'u32[144,128]{1,0:T(1,128)}', space=vmem, size = 0x12000, scoped, tag = 'internal scratch']
  #allocation2 [shape = 'bf16[64,64]{1,0:T(16,128)(2,1)}', space=vmem, size = 0x4000, scoped, tag = 'scratch operand']
  %s0 = inlined_call_operand.vmem [shape: bf16[2,48,16], index: 0, kind: input, shape index: {}]
  %s1 = inlined_call_operand.vmem [shape: bf16[2,48,16], index: 1, kind: input, shape index: {}]
  %s2 = inlined_call_operand.vmem [shape: bf16[2,48,16], index: 2, kind: input, shape index: {}]
  %s3 = inlined_call_operand.vmem [shape: bf16[2,48,16], index: 3, kind: input, shape index: {}]
  %s4 = inlined_call_operand.vmem [shape: bf16[64,256], index: 4, kind: input, shape index: {}]
  %s5 = inlined_call_operand.vmem [shape: f32[128,128], index: 5, kind: input, shape index: {}]
  %s6 = inlined_call_operand.vmem [shape: f32[2,1,1,1], index: 6, kind: output, shape index: {0}]
  %s7 = inlined_call_operand.vmem [shape: f32[2,1,1,1], index: 7, kind: output, shape index: {1}]
  %8 = xla_tuple %s6, %s7
  %s9 = sld [smem:[#allocation0]]
  $region65: #{tpu_custom_call.1} parent=0
    _
  %s11 = ssub.s32 1, %s9
  %s12 = scalar_select 0, %s11, %s9
  loop: start=0, step=1, limit=4
  $region2: #{tpu_custom_call.1} parent=0 // loop_pre_header
    _
  $region3: #{tpu_custom_call.1} parent=0 // loop_header
    %s14 = sphi 0, %s18
    %p15 = scmp.ge.s32.totalorder %s14, 4
    %s21 = sphi 0, %s33
    %s22 = sphi 0, %s29
    %s23 = sphi 0, %s21
    %s24 = sphi 0, %s22
    %s25 = sphi 0, %s23
    %s26 = sphi 0, %s24
    %s38 = sphi 0, %s40
    %s41 = sphi 0, %s38
    %s42 = sphi 0, %s41
    %s58 = sphi 0, %s42
    %s70 = sphi 0, %s72
    %s73 = sphi 0, %s70
    %s74 = sphi 0, %s73
    %s90 = sphi 0, %s74
    %s98 = sphi 0, %s100
    %s101 = sphi 0, %s98
    %s102 = sphi 0, %s101
    %s118 = sphi 0, %s102
    %s130 = sphi 0, %s132
    %s133 = sphi 0, %s130
    %s134 = sphi 0, %s133
    %s150 = sphi 0, %s134
    %s154 = sphi 0, %s154
    %s156 = sphi 0, %s154
    %s157 = sphi 0, %s156
    %s171 = sphi 0, %s157
    %s175 = sphi 0, %s175
    %s177 = sphi 0, %s175
    %s178 = sphi 0, %s177
    %s192 = sphi 0, %s178
    %s200 = sphi 0, %s202
    %s203 = sphi 0, %s200
    %s204 = sphi 0, %s203
    %s220 = sphi 0, %s204
    %s228 = sphi 0, %s230
    %s231 = sphi 0, %s228
    %s232 = sphi 0, %s231
    %s248 = sphi 0, %s232
  $region4: #{tpu_custom_call.1} parent=0 // loop_header_branch
    %17 = sbr.rel (%p15) target = $region8
  $region5: #{tpu_custom_call.1} parent=0 // loop_body
    %s19 = ssub.s32 %s14, 1
    %s20 = ssub.s32 %s14, 2
    %s27 = sadd.s32 1, %s22
    %p28 = scmp.ge.s32.totalorder %s27, 1
    %s29 = scalar_select %p28, 0, %s27
    %s30 = sadd.s32 1, %s21
    %s31 = scalar_select %p28, %s30, %s21
    %p32 = scmp.ge.s32.totalorder %s31, 2
    %s33 = scalar_select %p32, 0, %s31
    %s34 = ssub.s32 %s21, %s33
    %s35 = ssub.s32 %s22, %s29
    %s36 = sor.u32 %s34, %s35
    %p37 = scmp.eq.s32.totalorder %s36, 0
    %s39 = sadd.s32 %s38, 1
    %s40 = scalar_select %p37, %s38, %s39
    %p43 = pneg %p37
    %p44 = scmp.eq.s32.totalorder %s14, 1
    %p45 = por %p43, %p44
    %p46 = scmp.ne.s32.totalorder %s38, %s41
    %p47 = scmp.eq.s32.totalorder %s14, 0
    %p48 = por %p46, %p47
    %p49 = scmp.ne.s32.totalorder %s38, %s41
    %p50 = scmp.eq.s32.totalorder %s19, 1
    %p51 = por %p49, %p50
    %p52 = scmp.ne.s32.totalorder %s41, %s42
    %p53 = scmp.eq.s32.totalorder %s19, 0
    %p54 = por %p52, %p53
    %p55 = scmp.ne.s32.totalorder %s41, %s42
    %p56 = scmp.eq.s32.totalorder %s20, 1
    %p57 = por %p55, %p56
    %p59 = scmp.ne.s32.totalorder %s42, %s58
    %p60 = scmp.eq.s32.totalorder %s20, 0
    %p61 = por %p59, %p60
    %s62 = sadd.s32 %s22, 1
    %s63 = smul.u32 %s62, 2
    %s64 = sadd.s32 %s29, 1
    %s65 = smul.u32 %s64, 2
    %s66 = ssub.s32 %s21, %s33
    %s67 = ssub.s32 %s63, %s65
    %s68 = sor.u32 %s66, %s67
    %p69 = scmp.eq.s32.totalorder %s68, 0
    %s71 = sadd.s32 %s70, 1
    %s72 = scalar_select %p69, %s70, %s71
    %p75 = pneg %p69
    %p76 = scmp.eq.s32.totalorder %s14, 1
    %p77 = por %p75, %p76
    %p78 = scmp.ne.s32.totalorder %s70, %s73
    %p79 = scmp.eq.s32.totalorder %s14, 0
    %p80 = por %p78, %p79
    %p81 = scmp.ne.s32.totalorder %s70, %s73
    %p82 = scmp.eq.s32.totalorder %s19, 1
    %p83 = por %p81, %p82
    %p84 = scmp.ne.s32.totalorder %s73, %s74
    %p85 = scmp.eq.s32.totalorder %s19, 0
    %p86 = por %p84, %p85
    %p87 = scmp.ne.s32.totalorder %s73, %s74
    %p88 = scmp.eq.s32.totalorder %s20, 1
    %p89 = por %p87, %p88
    %p91 = scmp.ne.s32.totalorder %s74, %s90
    %p92 = scmp.eq.s32.totalorder %s20, 0
    %p93 = por %p91, %p92
    %s94 = ssub.s32 %s21, %s33
    %s95 = ssub.s32 %s22, %s29
    %s96 = sor.u32 %s94, %s95
    %p97 = scmp.eq.s32.totalorder %s96, 0
    %s99 = sadd.s32 %s98, 1
    %s100 = scalar_select %p97, %s98, %s99
    %p103 = pneg %p97
    %p104 = scmp.eq.s32.totalorder %s14, 1
    %p105 = por %p103, %p104
    %p106 = scmp.ne.s32.totalorder %s98, %s101
    %p107 = scmp.eq.s32.totalorder %s14, 0
    %p108 = por %p106, %p107
    %p109 = scmp.ne.s32.totalorder %s98, %s101
    %p110 = scmp.eq.s32.totalorder %s19, 1
    %p111 = por %p109, %p110
    %p112 = scmp.ne.s32.totalorder %s101, %s102
    %p113 = scmp.eq.s32.totalorder %s19, 0
    %p114 = por %p112, %p113
    %p115 = scmp.ne.s32.totalorder %s101, %s102
    %p116 = scmp.eq.s32.totalorder %s20, 1
    %p117 = por %p115, %p116
    %p119 = scmp.ne.s32.totalorder %s102, %s118
    %p120 = scmp.eq.s32.totalorder %s20, 0
    %p121 = por %p119, %p120
    %s122 = sadd.s32 %s22, 1
    %s123 = smul.u32 %s122, 2
    %s124 = sadd.s32 %s29, 1
    %s125 = smul.u32 %s124, 2
    %s126 = ssub.s32 %s21, %s33
    %s127 = ssub.s32 %s123, %s125
    %s128 = sor.u32 %s126, %s127
    %p129 = scmp.eq.s32.totalorder %s128, 0
    %s131 = sadd.s32 %s130, 1
    %s132 = scalar_select %p129, %s130, %s131
    %p135 = pneg %p129
    %p136 = scmp.eq.s32.totalorder %s14, 1
    %p137 = por %p135, %p136
    %p138 = scmp.ne.s32.totalorder %s130, %s133
    %p139 = scmp.eq.s32.totalorder %s14, 0
    %p140 = por %p138, %p139
    %p141 = scmp.ne.s32.totalorder %s130, %s133
    %p142 = scmp.eq.s32.totalorder %s19, 1
    %p143 = por %p141, %p142
    %p144 = scmp.ne.s32.totalorder %s133, %s134
    %p145 = scmp.eq.s32.totalorder %s19, 0
    %p146 = por %p144, %p145
    %p147 = scmp.ne.s32.totalorder %s133, %s134
    %p148 = scmp.eq.s32.totalorder %s20, 1
    %p149 = por %p147, %p148
    %p151 = scmp.ne.s32.totalorder %s134, %s150
    %p152 = scmp.eq.s32.totalorder %s20, 0
    %p153 = por %p151, %p152
    %s155 = sadd.s32 %s154, 1
    %p158 = scmp.eq.s32.totalorder %s14, 1
    %p159 = scmp.ne.s32.totalorder %s154, %s156
    %p160 = scmp.eq.s32.totalorder %s14, 0
    %p161 = por %p159, %p160
    %p162 = scmp.ne.s32.totalorder %s154, %s156
    %p163 = scmp.eq.s32.totalorder %s19, 1
    %p164 = por %p162, %p163
    %p165 = scmp.ne.s32.totalorder %s156, %s157
    %p166 = scmp.eq.s32.totalorder %s19, 0
    %p167 = por %p165, %p166
    %p168 = scmp.ne.s32.totalorder %s156, %s157
    %p169 = scmp.eq.s32.totalorder %s20, 1
    %p170 = por %p168, %p169
    %p172 = scmp.ne.s32.totalorder %s157, %s171
    %p173 = scmp.eq.s32.totalorder %s20, 0
    %p174 = por %p172, %p173
    %s176 = sadd.s32 %s175, 1
    %p179 = scmp.eq.s32.totalorder %s14, 1
    %p180 = scmp.ne.s32.totalorder %s175, %s177
    %p181 = scmp.eq.s32.totalorder %s14, 0
    %p182 = por %p180, %p181
    %p183 = scmp.ne.s32.totalorder %s175, %s177
    %p184 = scmp.eq.s32.totalorder %s19, 1
    %p185 = por %p183, %p184
    %p186 = scmp.ne.s32.totalorder %s177, %s178
    %p187 = scmp.eq.s32.totalorder %s19, 0
    %p188 = por %p186, %p187
    %p189 = scmp.ne.s32.totalorder %s177, %s178
    %p190 = scmp.eq.s32.totalorder %s20, 1
    %p191 = por %p189, %p190
    %p193 = scmp.ne.s32.totalorder %s178, %s192
    %p194 = scmp.eq.s32.totalorder %s20, 0
    %p195 = por %p193, %p194
    %s196 = ssub.s32 %s21, %s33
    %s197 = ssub.s32 %s22, %s29
    %s198 = sor.u32 %s196, %s197
    %p199 = scmp.eq.s32.totalorder %s198, 0
    %s201 = sadd.s32 %s200, 1
    %s202 = scalar_select %p199, %s200, %s201
    %p205 = pneg %p199
    %p206 = scmp.eq.s32.totalorder %s14, 1
    %p207 = por %p205, %p206
    %p208 = scmp.ne.s32.totalorder %s200, %s203
    %p209 = scmp.eq.s32.totalorder %s14, 0
    %p210 = por %p208, %p209
    %p211 = scmp.ne.s32.totalorder %s200, %s203
    %p212 = scmp.eq.s32.totalorder %s19, 1
    %p213 = por %p211, %p212
    %p214 = scmp.ne.s32.totalorder %s203, %s204
    %p215 = scmp.eq.s32.totalorder %s19, 0
    %p216 = por %p214, %p215
    %p217 = scmp.ne.s32.totalorder %s203, %s204
    %p218 = scmp.eq.s32.totalorder %s20, 1
    %p219 = por %p217, %p218
    %p221 = scmp.ne.s32.totalorder %s204, %s220
    %p222 = scmp.eq.s32.totalorder %s20, 0
    %p223 = por %p221, %p222
    %s224 = ssub.s32 %s21, %s33
    %s225 = ssub.s32 %s22, %s29
    %s226 = sor.u32 %s224, %s225
    %p227 = scmp.eq.s32.totalorder %s226, 0
    %s229 = sadd.s32 %s228, 1
    %s230 = scalar_select %p227, %s228, %s229
    %p233 = pneg %p227
    %p234 = scmp.eq.s32.totalorder %s14, 1
    %p235 = por %p233, %p234
    %p236 = scmp.ne.s32.totalorder %s228, %s231
    %p237 = scmp.eq.s32.totalorder %s14, 0
    %p238 = por %p236, %p237
    %p239 = scmp.ne.s32.totalorder %s228, %s231
    %p240 = scmp.eq.s32.totalorder %s19, 1
    %p241 = por %p239, %p240
    %p242 = scmp.ne.s32.totalorder %s231, %s232
    %p243 = scmp.eq.s32.totalorder %s19, 0
    %p244 = por %p242, %p243
    %p245 = scmp.ne.s32.totalorder %s231, %s232
    %p246 = scmp.eq.s32.totalorder %s20, 1
    %p247 = por %p245, %p246
    %p249 = scmp.ne.s32.totalorder %s232, %s248
    %p250 = scmp.eq.s32.totalorder %s20, 0
    %p251 = por %p249, %p250
    %p252 = scmp.le.s32.totalorder 1, %s14
    %p253 = scmp.lt.s32.totalorder %s14, 3
    %p254 = pnand %p252, %p253
    %p255 = pneg %p254
    // Predicated region
    $region9: #{tpu_custom_call.1} parent=5 // pred_check
      _
    $region10: #{tpu_custom_call.1} parent=5 // pred_check_branch
      %257 = sbr.rel (%p254) target = $region12
    $region11: #{tpu_custom_call.1} parent=5 // pred_region
      %s258 = ssub.s32 %s14, 1
      // Predicated region
      $region13: #{tpu_custom_call.1} parent=11 // pred_check
        %p259 = pneg %p167
      $region14: #{tpu_custom_call.1} parent=11 // pred_check_branch
        %261 = sbr.rel (%p259) target = $region16
      $region15: #{tpu_custom_call.1} parent=11 // pred_region
        _
      $region16: #{tpu_custom_call.1} parent=11 // pred_fallthru
        _
      // Predicated region
      $region17: #{tpu_custom_call.1} parent=11 // pred_check
        %p262 = pneg %p188
      $region18: #{tpu_custom_call.1} parent=11 // pred_check_branch
        %264 = sbr.rel (%p262) target = $region20
      $region19: #{tpu_custom_call.1} parent=11 // pred_region
        _
      $region20: #{tpu_custom_call.1} parent=11 // pred_fallthru
        _
    $region12: #{tpu_custom_call.1} parent=5 // pred_fallthru
      _
    %p265 = scmp.lt.s32.totalorder %s14, 2
    // Predicated region
    $region21: #{tpu_custom_call.1} parent=5 // pred_check
      %p266 = pneg %p265
    $region22: #{tpu_custom_call.1} parent=5 // pred_check_branch
      %268 = sbr.rel (%p266) target = $region24
    $region23: #{tpu_custom_call.1} parent=5 // pred_region
      // Predicated region
      $region25: #{tpu_custom_call.1} parent=23 // pred_check
        %p269 = pneg %p48
      $region26: #{tpu_custom_call.1} parent=23 // pred_check_branch
        %271 = sbr.rel (%p269) target = $region28
      $region27: #{tpu_custom_call.1} parent=23 // pred_region
        %s272 = smul.u32 4, %s22
        %s273 = ssub.s32 6, %s272
        %p274 = scmp.lt.s32.totalorder %s273, 4
        %s275 = scalar_select %p274, %s273, 4
        %s276 = smul.u32 64, %s275
        %p277 = scmp.lt.s32.totalorder %s21, 1
        %s278 = scalar_select %p277, %s21, 1
        %p279 = scmp.lt.s32.totalorder %s272, 5
        %s280 = scalar_select %p279, %s272, 5
        %s281 = smul.addr %s278, 6
        %s282 = sadd.s32 %s280, %s281
        %s283 = smul.addr %s282, 4
        %s284 = scalar_lea.vmem %s0, %s283
        %s285 = smul.u32 4, %s22
        %s286 = ssub.s32 6, %s285
        %p287 = scmp.lt.s32.totalorder %s286, 4
        %s288 = scalar_select %p287, %s286, 4
        %s289 = smul.u32 64, %s288
      $region28: #{tpu_custom_call.1} parent=23 // pred_fallthru
        _
      // Predicated region
      $region29: #{tpu_custom_call.1} parent=23 // pred_check
        %p290 = pneg %p80
      $region30: #{tpu_custom_call.1} parent=23 // pred_check_branch
        %292 = sbr.rel (%p290) target = $region32
      $region31: #{tpu_custom_call.1} parent=23 // pred_region
        %s293 = sadd.s32 %s22, 1
        %s294 = smul.u32 %s293, 2
        %s295 = smul.u32 2, %s294
        %p296 = scmp.lt.s32.totalorder %s21, 1
        %s297 = scalar_select %p296, %s21, 1
        %p298 = scmp.lt.s32.totalorder %s295, 5
        %s299 = scalar_select %p298, %s295, 5
        %s300 = smul.addr %s297, 6
        %s301 = sadd.s32 %s299, %s300
        %s302 = smul.addr %s301, 4
        %s303 = scalar_lea.vmem %s1, %s302
        %s304 = sadd.s32 %s22, 1
        %s305 = smul.u32 %s304, 2
        %s306 = smul.u32 2, %s305
      $region32: #{tpu_custom_call.1} parent=23 // pred_fallthru
        _
      // Predicated region
      $region33: #{tpu_custom_call.1} parent=23 // pred_check
        %p307 = pneg %p108
      $region34: #{tpu_custom_call.1} parent=23 // pred_check_branch
        %309 = sbr.rel (%p307) target = $region36
      $region35: #{tpu_custom_call.1} parent=23 // pred_region
        %s310 = smul.u32 4, %s22
        %s311 = ssub.s32 6, %s310
        %p312 = scmp.lt.s32.totalorder %s311, 4
        %s313 = scalar_select %p312, %s311, 4
        %s314 = smul.u32 64, %s313
        %p315 = scmp.lt.s32.totalorder %s21, 1
        %s316 = scalar_select %p315, %s21, 1
        %p317 = scmp.lt.s32.totalorder %s310, 5
        %s318 = scalar_select %p317, %s310, 5
        %s319 = smul.addr %s316, 6
        %s320 = sadd.s32 %s318, %s319
        %s321 = smul.addr %s320, 4
        %s322 = scalar_lea.vmem %s2, %s321
        %s323 = smul.u32 4, %s22
        %s324 = ssub.s32 6, %s323
        %p325 = scmp.lt.s32.totalorder %s324, 4
        %s326 = scalar_select %p325, %s324, 4
        %s327 = smul.u32 64, %s326
      $region36: #{tpu_custom_call.1} parent=23 // pred_fallthru
        _
      // Predicated region
      $region37: #{tpu_custom_call.1} parent=23 // pred_check
        %p328 = pneg %p140
      $region38: #{tpu_custom_call.1} parent=23 // pred_check_branch
        %330 = sbr.rel (%p328) target = $region40
      $region39: #{tpu_custom_call.1} parent=23 // pred_region
        %s331 = sadd.s32 %s22, 1
        %s332 = smul.u32 %s331, 2
        %s333 = smul.u32 2, %s332
        %p334 = scmp.lt.s32.totalorder %s21, 1
        %s335 = scalar_select %p334, %s21, 1
        %p336 = scmp.lt.s32.totalorder %s333, 5
        %s337 = scalar_select %p336, %s333, 5
        %s338 = smul.addr %s335, 6
        %s339 = sadd.s32 %s337, %s338
        %s340 = smul.addr %s339, 4
        %s341 = scalar_lea.vmem %s3, %s340
        %s342 = sadd.s32 %s22, 1
        %s343 = smul.u32 %s342, 2
        %s344 = smul.u32 2, %s343
      $region40: #{tpu_custom_call.1} parent=23 // pred_fallthru
        _
    $region24: #{tpu_custom_call.1} parent=5 // pred_fallthru
      _
    %p345 = scmp.le.s32.totalorder 1, %s14
    %p346 = scmp.lt.s32.totalorder %s14, 3
    %p347 = pnand %p345, %p346
    %p348 = pneg %p347
    // Predicated region
    $region41: #{tpu_custom_call.1} parent=5 // pred_check
      _
    $region42: #{tpu_custom_call.1} parent=5 // pred_check_branch
      %350 = sbr.rel (%p347) target = $region44
    $region43: #{tpu_custom_call.1} parent=5 // pred_region
      %s351 = ssub.s32 %s14, 1
      %s352 = smul.u32 4, %s24
      %s353 = ssub.s32 6, %s352
      %p354 = scmp.lt.s32.totalorder %s353, 4
      %s355 = scalar_select %p354, %s353, 4
      %s356 = smul.u32 64, %s355
      %p357 = scmp.lt.s32.totalorder %s23, 1
      %s358 = scalar_select %p357, %s23, 1
      %p359 = scmp.lt.s32.totalorder %s352, 5
      %s360 = scalar_select %p359, %s352, 5
      %s361 = smul.addr %s358, 6
      %s362 = sadd.s32 %s360, %s361
      %s363 = smul.addr %s362, 4
      %s364 = scalar_lea.vmem %s0, %s363
      %p365 = pneg %p54
      %p366 = pneg %p51
      %s367 = sadd.s32 %s24, 1
      %s368 = smul.u32 %s367, 2
      %s369 = smul.u32 2, %s368
      %p370 = scmp.lt.s32.totalorder %s23, 1
      %s371 = scalar_select %p370, %s23, 1
      %p372 = scmp.lt.s32.totalorder %s369, 5
      %s373 = scalar_select %p372, %s369, 5
      %s374 = smul.addr %s371, 6
      %s375 = sadd.s32 %s373, %s374
      %s376 = smul.addr %s375, 4
      %s377 = scalar_lea.vmem %s1, %s376
      %p378 = pneg %p86
      %p379 = pneg %p83
      %s380 = smul.u32 4, %s24
      %s381 = ssub.s32 6, %s380
      %p382 = scmp.lt.s32.totalorder %s381, 4
      %s383 = scalar_select %p382, %s381, 4
      %s384 = smul.u32 64, %s383
      %p385 = scmp.lt.s32.totalorder %s23, 1
      %s386 = scalar_select %p385, %s23, 1
      %p387 = scmp.lt.s32.totalorder %s380, 5
      %s388 = scalar_select %p387, %s380, 5
      %s389 = smul.addr %s386, 6
      %s390 = sadd.s32 %s388, %s389
      %s391 = smul.addr %s390, 4
      %s392 = scalar_lea.vmem %s2, %s391
      %p393 = pneg %p114
      %p394 = pneg %p111
      %s395 = sadd.s32 %s24, 1
      %s396 = smul.u32 %s395, 2
      %s397 = smul.u32 2, %s396
      %p398 = scmp.lt.s32.totalorder %s23, 1
      %s399 = scalar_select %p398, %s23, 1
      %p400 = scmp.lt.s32.totalorder %s397, 5
      %s401 = scalar_select %p400, %s397, 5
      %s402 = smul.addr %s399, 6
      %s403 = sadd.s32 %s401, %s402
      %s404 = smul.addr %s403, 4
      %s405 = scalar_lea.vmem %s3, %s404
      %p406 = pneg %p146
      %p407 = pneg %p143
      %p408 = pneg %p167
      %p409 = pneg %p164
      %p410 = pneg %p188
      %p411 = pneg %p185
      %p412 = pneg %p216
      %p413 = pneg %p213
      %p414 = scmp.lt.s32.totalorder %s23, 1
      %s415 = scalar_select %p414, %s23, 1
      %p416 = scmp.lt.s32.totalorder %s24, 0
      %s417 = scalar_select %p416, %s24, 0
      %s418 = sadd.s32 %s417, %s415
      %s419 = scalar_lea.vmem %s6, %s418
      %p420 = pneg %p244
      %p421 = pneg %p241
      %p422 = scmp.lt.s32.totalorder %s23, 1
      %s423 = scalar_select %p422, %s23, 1
      %p424 = scmp.lt.s32.totalorder %s24, 0
      %s425 = scalar_select %p424, %s24, 0
      %s426 = sadd.s32 %s425, %s423
      %s427 = scalar_lea.vmem %s7, %s426
      %s428 = smul.u32 4, %s24
      %s429 = ssub.s32 6, %s428
      %p430 = scmp.lt.s32.totalorder %s429, 4
      %s431 = scalar_select %p430, %s429, 4
      %s432 = smul.u32 64, %s431
      %p433 = scmp.lt.s32.totalorder %s23, 1
      %s434 = scalar_select %p433, %s23, 1
      %p435 = scmp.lt.s32.totalorder %s428, 5
      %s436 = scalar_select %p435, %s428, 5
      %s437 = smul.addr %s434, 6
      %s438 = sadd.s32 %s436, %s437
      %s439 = smul.addr %s438, 4
      %s440 = scalar_lea.vmem %s0, %s439
      %s441 = smul.u32 4, %s24
      %s442 = ssub.s32 6, %s441
      %p443 = scmp.lt.s32.totalorder %s442, 4
      %s444 = scalar_select %p443, %s442, 4
      %s445 = smul.u32 64, %s444
      %s446 = sadd.s32 %s24, 1
      %s447 = smul.u32 %s446, 2
      %s448 = smul.u32 2, %s447
      %p449 = scmp.lt.s32.totalorder %s23, 1
      %s450 = scalar_select %p449, %s23, 1
      %p451 = scmp.lt.s32.totalorder %s448, 5
      %s452 = scalar_select %p451, %s448, 5
      %s453 = smul.addr %s450, 6
      %s454 = sadd.s32 %s452, %s453
      %s455 = smul.addr %s454, 4
      %s456 = scalar_lea.vmem %s1, %s455
      %s457 = sadd.s32 %s24, 1
      %s458 = smul.u32 %s457, 2
      %s459 = smul.u32 2, %s458
      %s460 = smul.u32 4, %s24
      %s461 = ssub.s32 6, %s460
      %p462 = scmp.lt.s32.totalorder %s461, 4
      %s463 = scalar_select %p462, %s461, 4
      %s464 = smul.u32 64, %s463
      %p465 = scmp.lt.s32.totalorder %s23, 1
      %s466 = scalar_select %p465, %s23, 1
      %p467 = scmp.lt.s32.totalorder %s460, 5
      %s468 = scalar_select %p467, %s460, 5
      %s469 = smul.addr %s466, 6
      %s470 = sadd.s32 %s468, %s469
      %s471 = smul.addr %s470, 4
      %s472 = scalar_lea.vmem %s2, %s471
      %s473 = smul.u32 4, %s24
      %s474 = ssub.s32 6, %s473
      %p475 = scmp.lt.s32.totalorder %s474, 4
      %s476 = scalar_select %p475, %s474, 4
      %s477 = smul.u32 64, %s476
      %s478 = sadd.s32 %s24, 1
      %s479 = smul.u32 %s478, 2
      %s480 = smul.u32 2, %s479
      %p481 = scmp.lt.s32.totalorder %s23, 1
      %s482 = scalar_select %p481, %s23, 1
      %p483 = scmp.lt.s32.totalorder %s480, 5
      %s484 = scalar_select %p483, %s480, 5
      %s485 = smul.addr %s482, 6
      %s486 = sadd.s32 %s484, %s485
      %s487 = smul.addr %s486, 4
      %s488 = scalar_lea.vmem %s3, %s487
      %s489 = sadd.s32 %s24, 1
      %s490 = smul.u32 %s489, 2
      %s491 = smul.u32 2, %s490
      %p492 = scmp.lt.s32.totalorder %s23, 1
      %s493 = scalar_select %p492, %s23, 1
      %p494 = scmp.lt.s32.totalorder %s24, 0
      %s495 = scalar_select %p494, %s24, 0
      %s496 = sadd.s32 %s495, %s493
      %s497 = scalar_lea.vmem %s6, %s496
      %p498 = scmp.lt.s32.totalorder %s23, 1
      %s499 = scalar_select %p498, %s23, 1
      %p500 = scmp.lt.s32.totalorder %s24, 0
      %s501 = scalar_select %p500, %s24, 0
      %s502 = sadd.s32 %s501, %s499
      %s503 = scalar_lea.vmem %s7, %s502
      %v505 = vld [vmem:[%s440] sm:$0xf]
      %v506 = vld [vmem:[%s440 + $0x4] sm:$0xf]
      %v507 = vld [vmem:[%s440 + $0x8] sm:$0xf]
      %v508 = vld [vmem:[%s440 + $0xc] sm:$0xf]
      %v509 = vld [vmem:[%s456] sm:$0xf]
      %v510 = vld [vmem:[%s456 + $0x4] sm:$0xf]
      %v515 = vunpack.c.l.b16 %v505
      %v516 = vunpack.c.l.b16 %v506
      %v517 = vunpack.c.l.b16 %v507
      %v518 = vunpack.c.l.b16 %v508
      %v519 = vpack.c.b16 %v516, %v515
      %v520 = vpack.c.b16 %v518, %v517
      %v525 = vunpack.c.l.b16 %v509
      %v526 = vunpack.c.l.b16 %v510
      %v527 = vpack.c.b16 %v526, %v525
      %v528 = vld [vmem:[%s472] sm:$0xf]
      %v529 = vld [vmem:[%s472 + $0x4] sm:$0xf]
      %v530 = vld [vmem:[%s472 + $0x8] sm:$0xf]
      %v531 = vld [vmem:[%s472 + $0xc] sm:$0xf]
      %v532 = vld [vmem:[%s488] sm:$0xf]
      %v533 = vld [vmem:[%s488 + $0x4] sm:$0xf]
      %v538 = vunpack.c.l.b16 %v528
      %v539 = vunpack.c.l.b16 %v529
      %v540 = vunpack.c.l.b16 %v530
      %v541 = vunpack.c.l.b16 %v531
      %v542 = vpack.c.b16 %v539, %v538
      %v543 = vpack.c.b16 %v541, %v540
      %v548 = vunpack.c.l.b16 %v532
      %v549 = vunpack.c.l.b16 %v533
      %v550 = vpack.c.b16 %v549, %v548
      %vm551 = vcmask 130048
      %552 = vst.msk [vmem:[#allocation2] sm:$0xff] %vm551, %v519
      %553 = vst.msk [vmem:[#allocation2 + $0x8] sm:$0xff] %vm551, %v520
      %554 = vst.msk [vmem:[#allocation2 + $0x10] sm:$0xff] %vm551, %v542
      %555 = vst.msk [vmem:[#allocation2 + $0x18] sm:$0xff] %vm551, %v543
      %vm556 = vsmask.f32 7424
      %v558 = vshrl.u32 %v519, 16
      %v560 = vshll.u32 %v519, 16
      %v562 = vrot.slane %v560, 1
      %v563 = vor.u32 %v558, %v562
      %v565 = vshll.u32 %v520, 16
      %v567 = vrot.slane %v565, 1
      %v568 = vsel %vm556, %v563, %v567
      %v569 = vshrl.u32 %v520, 16
      %v571 = vor.u32 %v569, %v567
      %v573 = vshll.u32 %v527, 16
      %v575 = vrot.slane %v573, 1
      %v576 = vsel %vm556, %v571, %v575
      %577 = vrot.lane.b32.xlu0 %v568, 16
      %v578 = vpop.permute.xlu0 %577
      %579 = vrot.lane.b32.xlu0 %v576, 16
      %v580 = vpop.permute.xlu0 %579
      %vm583 = vcmask 261248
      %584 = vst.msk [vmem:[#allocation2] sm:$0xff] %vm583, %v578
      %585 = vst.msk [vmem:[#allocation2 + $0x8] sm:$0xff] %vm583, %v580
      %v587 = vshrl.u32 %v542, 16
      %v589 = vshll.u32 %v542, 16
      %v591 = vrot.slane %v589, 1
      %v592 = vor.u32 %v587, %v591
      %v594 = vshll.u32 %v543, 16
      %v596 = vrot.slane %v594, 1
      %v597 = vsel %vm556, %v592, %v596
      %v598 = vshrl.u32 %v543, 16
      %v600 = vor.u32 %v598, %v596
      %v602 = vshll.u32 %v550, 16
      %v604 = vrot.slane %v602, 1
      %v605 = vsel %vm556, %v600, %v604
      %606 = vrot.lane.b32.xlu0 %v597, 16
      %v607 = vpop.permute.xlu0 %606
      %608 = vrot.lane.b32.xlu0 %v605, 16
      %v609 = vpop.permute.xlu0 %608
      %612 = vst.msk [vmem:[#allocation2 + $0x10] sm:$0xff] %vm583, %v607
      %613 = vst.msk [vmem:[#allocation2 + $0x18] sm:$0xff] %vm583, %v609
      %vm614 = vcmask 1046528
      %v615 = vrot.slane %v519, 1
      %v616 = vrot.slane %v520, 1
      %v617 = vsel %vm614, %v615, %v616
      %v618 = vrot.slane %v527, 1
      %v619 = vsel %vm614, %v616, %v618
      %620 = vrot.lane.b32.xlu0 %v617, 32
      %v621 = vpop.permute.xlu0 %620
      %622 = vrot.lane.b32.xlu0 %v619, 32
      %v623 = vpop.permute.xlu0 %622
      %vm626 = vcmask 392448
      %627 = vst.msk [vmem:[#allocation2] sm:$0xff] %vm626, %v621
      %628 = vst.msk [vmem:[#allocation2 + $0x8] sm:$0xff] %vm626, %v623
      %v629 = vrot.slane %v542, 1
      %v630 = vrot.slane %v543, 1
      %v631 = vsel %vm614, %v629, %v630
      %v632 = vrot.slane %v550, 1
      %v633 = vsel %vm614, %v630, %v632
      %634 = vrot.lane.b32.xlu0 %v631, 32
      %v635 = vpop.permute.xlu0 %634
      %636 = vrot.lane.b32.xlu0 %v633, 32
      %v637 = vpop.permute.xlu0 %636
      %640 = vst.msk [vmem:[#allocation2 + $0x10] sm:$0xff] %vm626, %v635
      %641 = vst.msk [vmem:[#allocation2 + $0x18] sm:$0xff] %vm626, %v637
      %vm642 = vsmask.f32 6400
      %v643 = vrot.slane %v558, 1
      %v644 = vrot.slane %v560, 2
      %v645 = vor.u32 %v643, %v644
      %v646 = vrot.slane %v569, 1
      %v647 = vrot.slane %v565, 2
      %v648 = vor.u32 %v646, %v647
      %v649 = vsel %vm642, %v645, %v648
      %v650 = vshrl.u32 %v527, 16
      %v652 = vrot.slane %v650, 1
      %v653 = vrot.slane %v573, 2
      %v654 = vor.u32 %v652, %v653
      %v655 = vsel %vm642, %v648, %v654
      %656 = vrot.lane.b32.xlu0 %v649, 48
      %v657 = vpop.permute.xlu0 %656
      %658 = vrot.lane.b32.xlu0 %v655, 48
      %v659 = vpop.permute.xlu0 %658
      %vm662 = vcmask 523648
      %663 = vst.msk [vmem:[#allocation2] sm:$0xff] %vm662, %v657
      %664 = vst.msk [vmem:[#allocation2 + $0x8] sm:$0xff] %vm662, %v659
      %v665 = vrot.slane %v587, 1
      %v666 = vrot.slane %v589, 2
      %v667 = vor.u32 %v665, %v666
      %v668 = vrot.slane %v598, 1
      %v669 = vrot.slane %v594, 2
      %v670 = vor.u32 %v668, %v669
      %v671 = vsel %vm642, %v667, %v670
      %v672 = vshrl.u32 %v550, 16
      %v674 = vrot.slane %v672, 1
      %v675 = vrot.slane %v602, 2
      %v676 = vor.u32 %v674, %v675
      %v677 = vsel %vm642, %v670, %v676
      %678 = vrot.lane.b32.xlu0 %v671, 48
      %v679 = vpop.permute.xlu0 %678
      %680 = vrot.lane.b32.xlu0 %v677, 48
      %v681 = vpop.permute.xlu0 %680
      %684 = vst.msk [vmem:[#allocation2 + $0x10] sm:$0xff] %vm662, %v679
      %685 = vst.msk [vmem:[#allocation2 + $0x18] sm:$0xff] %vm662, %v681
      %v686 = vld [vmem:[#allocation2] sm:$0xff]
      %v687 = vld [vmem:[#allocation2 + $0x8] sm:$0xff]
      %v688 = vld [vmem:[#allocation2 + $0x10] sm:$0xff]
      %v689 = vld [vmem:[#allocation2 + $0x18] sm:$0xff]
      %v690 = vld [vmem:[%s4] sm:$0xff]
      %v691 = vld [vmem:[%s4 + $0x8] sm:$0xff]
      %v692 = vld [vmem:[%s4 + $0x10] sm:$0xff]
      %v693 = vld [vmem:[%s4 + $0x18] sm:$0xff]
      %v694 = vld [vmem:[%s4 + $0x20] sm:$0xff]
      %v695 = vld [vmem:[%s4 + $0x28] sm:$0xff]
      %v696 = vld [vmem:[%s4 + $0x30] sm:$0xff]
      %v697 = vld [vmem:[%s4 + $0x38] sm:$0xff]
      %v706 = vunpack.c.l.b16 %v690
      %v707 = vunpack.c.h.b16 %v690
      %v708 = vunpack.c.l.b16 %v691
      %v709 = vunpack.c.h.b16 %v691
      %v710 = vunpack.c.l.b16 %v692
      %v711 = vunpack.c.h.b16 %v692
      %v712 = vunpack.c.l.b16 %v693
      %v713 = vunpack.c.h.b16 %v693
      %v714 = vunpack.c.l.b16 %v694
      %v715 = vunpack.c.h.b16 %v694
      %v716 = vunpack.c.l.b16 %v695
      %v717 = vunpack.c.h.b16 %v695
      %v718 = vunpack.c.l.b16 %v696
      %v719 = vunpack.c.h.b16 %v696
      %v720 = vunpack.c.l.b16 %v697
      %v721 = vunpack.c.h.b16 %v697
      %v722 = vpack.c.b16 %v708, %v706
      %v723 = vpack.c.b16 %v709, %v707
      %v724 = vpack.c.b16 %v712, %v710
      %v725 = vpack.c.b16 %v713, %v711
      %v726 = vpack.c.b16 %v716, %v714
      %v727 = vpack.c.b16 %v717, %v715
      %v728 = vpack.c.b16 %v720, %v718
      %v729 = vpack.c.b16 %v721, %v719
      %vm738 = vcmask 523264
      %v740 = vsel %vm738, %v686, 0
      %v743 = vsel %vm738, %v687, 0
      %v746 = vsel %vm738, %v688, 0
      %v749 = vsel %vm738, %v689, 0
      %751 = vmatprep.subr.bf16.mxu0 %v723
      %752 = vmatpush1.bf16.msra.mxu0 %v722
      %753 = vmatprep.subr.bf16.mxu0 %v725
      %754 = vmatpush1.bf16.msra.mxu0 %v724
      %755 = vmatprep.subr.bf16.mxu0 %v727
      %756 = vmatpush1.bf16.msra.mxu0 %v726
      %757 = vmatprep.subr.bf16.mxu0 %v729
      %758 = vmatpush1.bf16.msra.mxu0 %v728
      %759 = vmatprep.subr.bf16.mxu0 0
      %760 = vmatpush1.bf16.msra.mxu0 0
      %761 = vmatprep.subr.bf16.mxu0 0
      %762 = vmatpush1.bf16.msra.mxu0 0
      %763 = vmatprep.subr.bf16.mxu0 0
      %764 = vmatpush1.bf16.msra.mxu0 0
      %765 = vmatprep.subr.bf16.mxu0 0
      %766 = vmatpush1.bf16.msra.mxu0 0
      %767 = vmatprep.subr.bf16.mxu0 0
      %768 = vmatpush1.bf16.msra.mxu0 0
      %769 = vmatprep.subr.bf16.mxu0 0
      %770 = vmatpush1.bf16.msra.mxu0 0
      %771 = vmatprep.subr.bf16.mxu0 0
      %772 = vmatpush1.bf16.msra.mxu0 0
      %773 = vmatprep.subr.bf16.mxu0 0
      %774 = vmatpush1.bf16.msra.mxu0 0
      %775 = vmatprep.subr.bf16.mxu0 0
      %776 = vmatpush1.bf16.msra.mxu0 0
      %777 = vmatprep.subr.bf16.mxu0 0
      %778 = vmatpush1.bf16.msra.mxu0 0
      %779 = vmatprep.subr.bf16.mxu0 0
      %780 = vmatpush1.bf16.msra.mxu0 0
      %781 = vmatprep.subr.bf16.mxu0 0
      %782 = vmatpush1.bf16.msra.mxu0 0
      %783 = vmatprep.mubr.bf16.mxu0 0
      %784 = vmatmul.mubr.bf16.gmra.mrb[0].mxu0 %v740
      %v785 = vpop.f32.mrb[0].mxu0
      %v786 = vadd.f32 0.0, %v785
      %v787 = vpop.f32.mrb[0].mxu0
      %v788 = vadd.f32 0.0, %v787
      %v789 = vpop.f32.mrb[0].mxu0
      %v790 = vadd.f32 0.0, %v789
      %v791 = vpop.f32.mrb[0].mxu0
      %v792 = vadd.f32 0.0, %v791
      %793 = vmatprep.mubr.bf16.mxu0 0
      %794 = vmatmul.mubr.bf16.gmra.mrb[0].mxu0 %v743
      %v795 = vpop.f32.mrb[0].mxu0
      %v796 = vadd.f32 0.0, %v795
      %v797 = vpop.f32.mrb[0].mxu0
      %v798 = vadd.f32 0.0, %v797
      %v799 = vpop.f32.mrb[0].mxu0
      %v800 = vadd.f32 0.0, %v799
      %v801 = vpop.f32.mrb[0].mxu0
      %v802 = vadd.f32 0.0, %v801
      %803 = vmatprep.mubr.bf16.mxu0 0
      %804 = vmatmul.mubr.bf16.gmra.mrb[0].mxu0 %v746
      %v805 = vpop.f32.mrb[0].mxu0
      %v806 = vadd.f32 0.0, %v805
      %v807 = vpop.f32.mrb[0].mxu0
      %v808 = vadd.f32 0.0, %v807
      %v809 = vpop.f32.mrb[0].mxu0
      %v810 = vadd.f32 0.0, %v809
      %v811 = vpop.f32.mrb[0].mxu0
      %v812 = vadd.f32 0.0, %v811
      %813 = vmatprep.mubr.bf16.mxu0 0
      %814 = vmatmul.mubr.bf16.gmra.mrb[0].mxu0 %v749
      %v815 = vpop.f32.mrb[0].mxu0
      %v816 = vadd.f32 0.0, %v815
      %v817 = vpop.f32.mrb[0].mxu0
      %v818 = vadd.f32 0.0, %v817
      %v819 = vpop.f32.mrb[0].mxu0
      %v820 = vadd.f32 0.0, %v819
      %v821 = vpop.f32.mrb[0].mxu0
      %v822 = vadd.f32 0.0, %v821
      %823 = vdwg.mxu0
      %v824 = vmul.f32 %v786, %v786
      %v825 = vmul.f32 %v790, %v790
      %v826 = vmul.f32 %v796, %v796
      %v827 = vmul.f32 %v800, %v800
      %v828 = vmul.f32 %v806, %v806
      %v829 = vmul.f32 %v810, %v810
      %v830 = vmul.f32 %v816, %v816
      %v831 = vmul.f32 %v820, %v820
      %v832 = vmul.f32 %v788, %v788
      %v833 = vmul.f32 %v792, %v792
      %v834 = vmul.f32 %v798, %v798
      %v835 = vmul.f32 %v802, %v802
      %v836 = vmul.f32 %v808, %v808
      %v837 = vmul.f32 %v812, %v812
      %v838 = vmul.f32 %v818, %v818
      %v839 = vmul.f32 %v822, %v822
      %v840 = vadd.f32 %v824, %v832
      %v841 = vadd.f32 %v825, %v833
      %v842 = vadd.f32 %v826, %v834
      %v843 = vadd.f32 %v827, %v835
      %v844 = vadd.f32 %v828, %v836
      %v845 = vadd.f32 %v829, %v837
      %v846 = vadd.f32 %v830, %v838
      %v847 = vadd.f32 %v831, %v839
      %v848 = vld [vmem:[%s5] sm:$0xff]
      %v849 = vld [vmem:[%s5 + $0x8] sm:$0xff]
      %v850 = vld [vmem:[%s5 + $0x10] sm:$0xff]
      %v851 = vld [vmem:[%s5 + $0x18] sm:$0xff]
      %v852 = vld [vmem:[%s5 + $0x20] sm:$0xff]
      %v853 = vld [vmem:[%s5 + $0x28] sm:$0xff]
      %v854 = vld [vmem:[%s5 + $0x30] sm:$0xff]
      %v855 = vld [vmem:[%s5 + $0x38] sm:$0xff]
      %v856 = vld [vmem:[%s5 + $0x40] sm:$0xff]
      %v857 = vld [vmem:[%s5 + $0x48] sm:$0xff]
      %v858 = vld [vmem:[%s5 + $0x50] sm:$0xff]
      %v859 = vld [vmem:[%s5 + $0x58] sm:$0xff]
      %v860 = vld [vmem:[%s5 + $0x60] sm:$0xff]
      %v861 = vld [vmem:[%s5 + $0x68] sm:$0xff]
      %v862 = vld [vmem:[%s5 + $0x70] sm:$0xff]
      %v863 = vld [vmem:[%s5 + $0x78] sm:$0xff]
      %864 = vmatprep.subr.mxu0 0.0
      %865 = vmatpush1.msra.mxu0 %v848
      %866 = vmatprep.subr.mxu0 0.0
      %867 = vmatpush1.msra.mxu0 %v849
      %868 = vmatprep.subr.mxu0 0.0
      %869 = vmatpush1.msra.mxu0 %v850
      %870 = vmatprep.subr.mxu0 0.0
      %871 = vmatpush1.msra.mxu0 %v851
      %872 = vmatprep.subr.mxu0 0.0
      %873 = vmatpush1.msra.mxu0 %v852
      %874 = vmatprep.subr.mxu0 0.0
      %875 = vmatpush1.msra.mxu0 %v853
      %876 = vmatprep.subr.mxu0 0.0
      %877 = vmatpush1.msra.mxu0 %v854
      %878 = vmatprep.subr.mxu0 0.0
      %879 = vmatpush1.msra.mxu0 %v855
      %880 = vmatprep.subr.mxu0 0.0
      %881 = vmatpush1.msra.mxu0 %v856
      %882 = vmatprep.subr.mxu0 0.0
      %883 = vmatpush1.msra.mxu0 %v857
      %884 = vmatprep.subr.mxu0 0.0
      %885 = vmatpush1.msra.mxu0 %v858
      %886 = vmatprep.subr.mxu0 0.0
      %887 = vmatpush1.msra.mxu0 %v859
      %888 = vmatprep.subr.mxu0 0.0
      %889 = vmatpush1.msra.mxu0 %v860
      %890 = vmatprep.subr.mxu0 0.0
      %891 = vmatpush1.msra.mxu0 %v861
      %892 = vmatprep.subr.mxu0 0.0
      %893 = vmatpush1.msra.mxu0 %v862
      %894 = vmatprep.subr.mxu0 0.0
      %895 = vmatpush1.msra.mxu0 %v863
      %896 = vmatprep.subr.mxu0 0.0
      %897 = vmatpush1.msra.mxu0 0.0
      %898 = vmatprep.subr.mxu0 0.0
      %899 = vmatpush1.msra.mxu0 0.0
      %900 = vmatprep.subr.mxu0 0.0
      %901 = vmatpush1.msra.mxu0 0.0
      %902 = vmatprep.subr.mxu0 0.0
      %903 = vmatpush1.msra.mxu0 0.0
      %904 = vmatprep.subr.mxu0 0.0
      %905 = vmatpush1.msra.mxu0 0.0
      %906 = vmatprep.subr.mxu0 0.0
      %907 = vmatpush1.msra.mxu0 0.0
      %908 = vmatprep.subr.mxu0 0.0
      %909 = vmatpush1.msra.mxu0 0.0
      %910 = vmatprep.subr.mxu0 0.0
      %911 = vmatpush1.msra.mxu0 0.0
      %912 = vmatprep.subr.mxu0 0.0
      %913 = vmatpush1.msra.mxu0 0.0
      %914 = vmatprep.subr.mxu0 0.0
      %915 = vmatpush1.msra.mxu0 0.0
      %916 = vmatprep.subr.mxu0 0.0
      %917 = vmatpush1.msra.mxu0 0.0
      %918 = vmatprep.subr.mxu0 0.0
      %919 = vmatpush1.msra.mxu0 0.0
      %920 = vmatprep.subr.mxu0 0.0
      %921 = vmatpush1.msra.mxu0 0.0
      %922 = vmatprep.subr.mxu0 0.0
      %923 = vmatpush1.msra.mxu0 0.0
      %924 = vmatprep.subr.mxu0 0.0
      %925 = vmatpush1.msra.mxu0 0.0
      %926 = vmatprep.subr.mxu0 0.0
      %927 = vmatpush1.msra.mxu0 0.0
      %928 = vmatprep.mubr.f32.mxu0 0.0
      %929 = vmatmul.mubr.f32.gmra.mrb[0].mxu0 %v840
      %v930 = vpop.f32.mrb[0].mxu0
      %v931 = vadd.f32 1e-05, %v930
      %v932 = vpop.f32.mrb[0].mxu0
      %933 = vmatprep.mubr.f32.mxu0 0.0
      %934 = vmatmul.mubr.f32.gmra.mrb[0].mxu0 %v841
      %v935 = vpop.f32.mrb[0].mxu0
      %v936 = vadd.f32 1e-05, %v935
      %v937 = vpop.f32.mrb[0].mxu0
      %938 = vmatprep.mubr.f32.mxu0 0.0
      %939 = vmatmul.mubr.f32.gmra.mrb[0].mxu0 %v842
      %v940 = vpop.f32.mrb[0].mxu0
      %v941 = vadd.f32 1e-05, %v940
      %v942 = vpop.f32.mrb[0].mxu0
      %943 = vmatprep.mubr.f32.mxu0 0.0
      %944 = vmatmul.mubr.f32.gmra.mrb[0].mxu0 %v843
      %v945 = vpop.f32.mrb[0].mxu0
      %v946 = vadd.f32 1e-05, %v945
      %v947 = vpop.f32.mrb[0].mxu0
      %948 = vmatprep.mubr.f32.mxu0 0.0
      %949 = vmatmul.mubr.f32.gmra.mrb[0].mxu0 %v844
      %v950 = vpop.f32.mrb[0].mxu0
      %v951 = vadd.f32 1e-05, %v950
      %v952 = vpop.f32.mrb[0].mxu0
      %953 = vmatprep.mubr.f32.mxu0 0.0
      %954 = vmatmul.mubr.f32.gmra.mrb[0].mxu0 %v845
      %v955 = vpop.f32.mrb[0].mxu0
      %v956 = vadd.f32 1e-05, %v955
      %v957 = vpop.f32.mrb[0].mxu0
      %958 = vmatprep.mubr.f32.mxu0 0.0
      %959 = vmatmul.mubr.f32.gmra.mrb[0].mxu0 %v846
      %v960 = vpop.f32.mrb[0].mxu0
      %v961 = vadd.f32 1e-05, %v960
      %v962 = vpop.f32.mrb[0].mxu0
      %963 = vmatprep.mubr.f32.mxu0 0.0
      %964 = vmatmul.mubr.f32.gmra.mrb[0].mxu0 %v847
      %v965 = vpop.f32.mrb[0].mxu0
      %v966 = vadd.f32 1e-05, %v965
      %v967 = vpop.f32.mrb[0].mxu0
      %968 = vdwg.mxu0
      %v969 = vlog2.pop %v931
      %v970 = vmul.f32 %v969, 0.6931472
      %v971 = vlog2.pop %v936
      %v972 = vmul.f32 %v971, 0.6931472
      %v973 = vlog2.pop %v941
      %v974 = vmul.f32 %v973, 0.6931472
      %v975 = vlog2.pop %v946
      %v976 = vmul.f32 %v975, 0.6931472
      %v977 = vlog2.pop %v951
      %v978 = vmul.f32 %v977, 0.6931472
      %v979 = vlog2.pop %v956
      %v980 = vmul.f32 %v979, 0.6931472
      %v981 = vlog2.pop %v961
      %v982 = vmul.f32 %v981, 0.6931472
      %v983 = vlog2.pop %v966
      %v984 = vmul.f32 %v983, 0.6931472
      %v985 = vadd.f32 %v970, 4.0
      %v986 = vadd.f32 %v972, 4.0
      %v987 = vadd.f32 %v974, 4.0
      %v988 = vadd.f32 %v976, 4.0
      %v989 = vadd.f32 %v978, 4.0
      %v990 = vadd.f32 %v980, 4.0
      %v991 = vadd.f32 %v982, 4.0
      %v992 = vadd.f32 %v984, 4.0
      %v993 = vmul.f32 %v985, 0.25
      %v994 = vmul.f32 %v986, 0.25
      %v995 = vmul.f32 %v987, 0.25
      %v996 = vmul.f32 %v988, 0.25
      %v997 = vmul.f32 %v989, 0.25
      %v998 = vmul.f32 %v990, 0.25
      %v999 = vmul.f32 %v991, 0.25
      %v1000 = vmul.f32 %v992, 0.25
      %v1001 = vsub.f32 %v997, %v993
      %v1002 = vsub.f32 %v998, %v994
      %v1003 = vsub.f32 %v999, %v995
      %v1004 = vsub.f32 %v1000, %v996
      %v1005 = vand.u32 2147483647, %v1001
      %v1006 = vand.u32 2147483647, %v1002
      %v1007 = vand.u32 2147483647, %v1003
      %v1008 = vand.u32 2147483647, %v1004
      %v1009 = vand.u32 2147483647, %v997
      %v1010 = vand.u32 2147483647, %v998
      %v1011 = vand.u32 2147483647, %v999
      %v1012 = vand.u32 2147483647, %v1000
      %v1013 = vlaneseq
      %v1014 = vshrl.u32 %v1013, 7
      %v1015 = vadd.s32 %v1014, 8
      %v1016 = vadd.s32 %v1014, 16
      %v1017 = vadd.s32 %v1014, 24
      %v1018 = vlaneseq
      %v1019 = vand.u32 %v1018, 127
      %p1020 = scmp.eq.s32.totalorder %s24, 0
      %s1021 = scalar_select %p1020, 17, 32
      %v1022 = vstv %s1021
      %vm1023 = vcmp.lt.s32.totalorder %v1014, %v1022
      %vm1024 = vcmp.lt.s32.totalorder %v1015, %v1022
      %vm1025 = vcmp.lt.s32.totalorder %v1016, %v1022
      %vm1026 = vcmp.lt.s32.totalorder %v1017, %v1022
      %vm1027 = vcmp.lt.s32.totalorder %v1019, 16
      %vm1028 = vmand %vm1023, %vm1027
      %vm1029 = vmand %vm1024, %vm1027
      %vm1030 = vmand %vm1025, %vm1027
      %vm1031 = vmand %vm1026, %vm1027
      %v1032 = vsel %vm1028, %v1005, 0.0
      %v1033 = vsel %vm1029, %v1006, 0.0
      %v1034 = vsel %vm1030, %v1007, 0.0
      %v1035 = vsel %vm1031, %v1008, 0.0
      %v1036 = vsel %vm1028, %v1009, 0.0
      %v1037 = vsel %vm1029, %v1010, 0.0
      %v1038 = vsel %vm1030, %v1011, 0.0
      %v1039 = vsel %vm1031, %v1012, 0.0
      %v1040 = vadd.f32 %v1032, %v1033
      %v1041 = vadd.f32 %v1040, %v1034
      %v1042 = vadd.f32 %v1041, %v1035
      %1043 = vadd.xlane.f32.xlu0 %v1042
      %v1044 = vpop.xlane.xlu0 %1043
      %v1045 = vrot.slane %v1044, 4
      %v1046 = vadd.f32 %v1044, %v1045
      %v1047 = vrot.slane %v1046, 2
      %v1048 = vadd.f32 %v1046, %v1047
      %v1049 = vrot.slane %v1048, 1
      %v1050 = vadd.f32 %v1048, %v1049
      %s1051 = vtos %v1050
      %v1052 = vstv %s1051
      %vm1053 = vcmask 0
      %1054 = vst.msk [vmem:[%s497] sm:$0x1] %vm1053, %v1052
      %v1055 = vadd.f32 %v1036, %v1037
      %v1056 = vadd.f32 %v1055, %v1038
      %v1057 = vadd.f32 %v1056, %v1039
      %1058 = vadd.xlane.f32.xlu0 %v1057
      %v1059 = vpop.xlane.xlu0 %1058
      %v1060 = vrot.slane %v1059, 4
      %v1061 = vadd.f32 %v1059, %v1060
      %v1062 = vrot.slane %v1061, 2
      %v1063 = vadd.f32 %v1061, %v1062
      %v1064 = vrot.slane %v1063, 1
      %v1065 = vadd.f32 %v1063, %v1064
      %s1066 = vtos %v1065
      %v1067 = vstv %s1066
      %1068 = vst.msk [vmem:[%s503] sm:$0x1] %vm1053, %v1067
      %p1069 = scmp.lt.s32.totalorder %s23, 1
      %s1070 = scalar_select %p1069, %s23, 1
      %p1071 = scmp.lt.s32.totalorder %s24, 0
      %s1072 = scalar_select %p1071, %s24, 0
      %s1073 = sadd.s32 %s1072, %s1070
      %s1074 = scalar_lea.vmem %s6, %s1073
      %p1075 = scmp.lt.s32.totalorder %s23, 1
      %s1076 = scalar_select %p1075, %s23, 1
      %p1077 = scmp.lt.s32.totalorder %s24, 0
      %s1078 = scalar_select %p1077, %s24, 0
      %s1079 = sadd.s32 %s1078, %s1076
      %s1080 = scalar_lea.vmem %s7, %s1079
      // Predicated region
      $region45: #{tpu_custom_call.1} parent=43 // pred_check
        %p1081 = pneg %p213
      $region46: #{tpu_custom_call.1} parent=43 // pred_check_branch
        %1083 = sbr.rel (%p1081) target = $region48
      $region47: #{tpu_custom_call.1} parent=43 // pred_region
        _
      $region48: #{tpu_custom_call.1} parent=43 // pred_fallthru
        _
      // Predicated region
      $region49: #{tpu_custom_call.1} parent=43 // pred_check
        %p1084 = pneg %p241
      $region50: #{tpu_custom_call.1} parent=43 // pred_check_branch
        %1086 = sbr.rel (%p1084) target = $region52
      $region51: #{tpu_custom_call.1} parent=43 // pred_region
        _
      $region52: #{tpu_custom_call.1} parent=43 // pred_fallthru
        _
    $region44: #{tpu_custom_call.1} parent=5 // pred_fallthru
      _
    %p1087 = scmp.le.s32.totalorder 2, %s14
    // Predicated region
    $region53: #{tpu_custom_call.1} parent=5 // pred_check
      %p1088 = pneg %p1087
    $region54: #{tpu_custom_call.1} parent=5 // pred_check_branch
      %1090 = sbr.rel (%p1088) target = $region56
    $region55: #{tpu_custom_call.1} parent=5 // pred_region
      %s1091 = ssub.s32 %s14, 2
      // Predicated region
      $region57: #{tpu_custom_call.1} parent=55 // pred_check
        %p1092 = pneg %p219
      $region58: #{tpu_custom_call.1} parent=55 // pred_check_branch
        %1094 = sbr.rel (%p1092) target = $region60
      $region59: #{tpu_custom_call.1} parent=55 // pred_region
        %p1095 = scmp.lt.s32.totalorder %s25, 1
        %s1096 = scalar_select %p1095, %s25, 1
        %p1097 = scmp.lt.s32.totalorder %s26, 0
        %s1098 = scalar_select %p1097, %s26, 0
        %s1099 = sadd.s32 %s1098, %s1096
        %s1100 = scalar_lea.vmem %s6, %s1099
      $region60: #{tpu_custom_call.1} parent=55 // pred_fallthru
        _
      // Predicated region
      $region61: #{tpu_custom_call.1} parent=55 // pred_check
        %p1101 = pneg %p247
      $region62: #{tpu_custom_call.1} parent=55 // pred_check_branch
        %1103 = sbr.rel (%p1101) target = $region64
      $region63: #{tpu_custom_call.1} parent=55 // pred_region
        %p1104 = scmp.lt.s32.totalorder %s25, 1
        %s1105 = scalar_select %p1104, %s25, 1
        %p1106 = scmp.lt.s32.totalorder %s26, 0
        %s1107 = scalar_select %p1106, %s26, 0
        %s1108 = sadd.s32 %s1107, %s1105
        %s1109 = scalar_lea.vmem %s7, %s1108
      $region64: #{tpu_custom_call.1} parent=55 // pred_fallthru
        _
    $region56: #{tpu_custom_call.1} parent=5 // pred_fallthru
      _
  $region6: #{tpu_custom_call.1} parent=0 // loop_footer
    %s18 = sadd.s32 1, %s14
  $region7: #{tpu_custom_call.1} parent=0 // loop_footer_branch
    %13 = sbr.rel target = $region3
  $region8: #{tpu_custom_call.1} parent=0 // loop_exit
    _

</llo_original>
